<compile_context>
chip_gen: v6e
topology: v6e:2x2x1
jax: 0.10.0
libtpu: 0.0.40
codegen_flags: <defaults>
</compile_context>

<pallas_src>
import functools

import jax
import jax.numpy as jnp
from jax.experimental import pallas as pl
from jax.experimental.pallas import tpu as pltpu


_NEG_BIG = -1e30   # additive mask bias; representable in bf16, exp(-1e30 - m) underflows to 0


def _vmem_budget_bytes():
    """Generation-aware VMEM budget (~70% of per-core capacity, capped for safety)."""
    cap = 64 * 1024 * 1024                        # conservative default (v7x: 64 MiB / TC)
    try:
        cap = int(pltpu.get_tpu_info().vmem_capacity_bytes)
    except Exception:
        pass
    return min(int(cap * 0.7), 96 * 1024 * 1024)


def _choose_tiling(n, vmem_budget):
    """Pad N to a multiple of 16 (bf16 sublane tile), then pick the destination-row tile
    that minimizes padded size (adjacency bytes ~ padded^2) while fitting the VMEM budget;
    among ties prefer >=2 grid steps (pipelining / megacore) and the larger tile."""
    n16 = max(16, -(-n // 16) * 16)
    # Per destination row resident in the attention kernel:
    #   bf16 adjacency double-buffer (2 * 2B) + ~4 f32 (tile, N) temporaries.
    per_row = (2 * 2 + 4 * 4) * n16
    max_tile = max(16, (vmem_budget // 2) // per_row)
    best = None
    for t in (1024, 512, 256, 128, 64, 32, 16):
        if t > max_tile:
            continue
        padded = -(-n16 // t) * t
        steps = padded // t
        key = (padded, 0 if steps >= 2 else 1, -t)
        if best is None or key < best[0]:
            best = (key, t, padded)
    if best is None:
        return 16, n16
    return best[1], best[2]


# --------------------------------------------------------------------------------------
# Kernel A: per-layer projection.  relu -> hW (stored once as bf16) -> batched alpha.
# --------------------------------------------------------------------------------------
def gat_project_kernel(h_ref, w_ref, att_t_ref, hw_ref, alpha_ref):
    h = jnp.maximum(h_ref[...], 0.0)                                   # relu (layer input)
    hw = jnp.dot(h, w_ref[...], preferred_element_type=jnp.float32)    # (N, heads*C) f32
    hw_ref[...] = hw.astype(jnp.bfloat16)                              # bf16 once, reused below
    # alpha[:, :H] = per-head alpha_src,  alpha[:, H:] = per-head alpha_dst
    alpha_ref[...] = jnp.dot(hw, att_t_ref[...], preferred_element_type=jnp.float32)


# --------------------------------------------------------------------------------------
# Kernel B: per-layer attention + aggregation over streamed bf16 adjacency-bias row-tiles.
# --------------------------------------------------------------------------------------
def gat_attention_kernel(adj_ref, asrc_ref, adst_ref, hwa_ref, bias_ref, *rest,
                         heads, out_ch, add_residual):
    if add_residual:
        res_ref, out_ref = rest
    else:
        (out_ref,) = rest

    neg = adj_ref[...].astype(jnp.float32)   # (tile_m, N) additive mask (0 / -1e30), hoisted cast
    a_src = asrc_ref[...]                    # (heads, N)   alpha_src for every source node
    a_dst = adst_ref[...]                    # (tile_m, heads)

    head_outs = []
    for k in range(heads):
        # e[i, j] = LeakyReLU(alpha_dst[i] + alpha_src[j]) + mask_bias[i, j]   (edge j -> i)
        e = a_dst[:, k:k + 1] + a_src[k:k + 1, :]          # (tile_m, N)
        e = jnp.maximum(e, 0.2 * e)                        # leaky relu, slope 0.2 (< 1)
        e = e + neg                                        # mask after leaky relu (matches ref)
        m = jnp.max(e, axis=1, keepdims=True)              # finite: self-loops guaranteed
        p = jnp.exp(e - m).astype(jnp.bfloat16)            # unnormalized; masked -> 0
        hk = hwa_ref[k]                                    # (N, C+1) bf16, last column = 1
        acc = jnp.dot(p, hk, preferred_element_type=jnp.float32)   # (tile_m, C+1)
        inv = pl.reciprocal(acc[:, out_ch:out_ch + 1], approx=True)
        head_outs.append(acc[:, :out_ch] * inv)            # normalization AFTER the MXU

    out = jnp.concatenate(head_outs, axis=1) + bias_ref[...]
    if add_residual:
        out = out + res_ref[...]
    out_ref[...] = out


# --------------------------------------------------------------------------------------
# Per-layer driver: projection (single step) + pipelined attention/aggregation.
# --------------------------------------------------------------------------------------
def _gat_layer(h, adj_bias, residual, w, att_cat_t, bias, *,
               heads, out_ch, tile_m, vmem_budget):
    n_pad, f_in = h.shape
    hc = heads * out_ch
    c1 = out_ch + 1

    # Projection: (n_pad, f_in) x (f_in, hc) is tiny -> single grid step (overhead-bound).
    hw, alpha = pl.pallas_call(
        gat_project_kernel,
        grid=(1,),
        in_specs=[pl.BlockSpec((n_pad, f_in), lambda i: (0, 0)),
                  pl.BlockSpec((f_in, hc), lambda i: (0, 0)),
                  pl.BlockSpec((hc, 2 * heads), lambda i: (0, 0))],
        out_specs=[pl.BlockSpec((n_pad, hc), lambda i: (0, 0)),
                   pl.BlockSpec((n_pad, 2 * heads), lambda i: (0, 0))],
        out_shape=[jax.ShapeDtypeStruct((n_pad, hc), jnp.bfloat16),
                   jax.ShapeDtypeStruct((n_pad, 2 * heads), jnp.float32)],
        compiler_params=pltpu.CompilerParams(
            dimension_semantics=("arbitrary",), vmem_limit_bytes=vmem_budget),
    )(h, w, att_cat_t)

    # Tiny layout glue outside the hot loop.
    alpha_src_t = alpha[:, :heads].T                           # (heads, n_pad)
    alpha_dst = alpha[:, heads:]                               # (n_pad, heads)
    hw_aug = jnp.concatenate(                                  # (heads, n_pad, C+1) bf16
        [hw.reshape(n_pad, heads, out_ch).transpose(1, 0, 2),
         jnp.ones((heads, n_pad, 1), jnp.bfloat16)], axis=-1)  # ones column -> softmax denom

    add_residual = residual is not None
    kernel = functools.partial(gat_attention_kernel, heads=heads, out_ch=out_ch,
                               add_residual=add_residual)

    in_specs = [pl.BlockSpec((tile_m, n_pad), lambda i: (i, 0)),        # bf16 adj bias (streamed)
                pl.BlockSpec((heads, n_pad), lambda i: (0, 0)),         # alpha_src^T (resident)
                pl.BlockSpec((tile_m, heads), lambda i: (i, 0)),        # alpha_dst rows
                pl.BlockSpec((heads, n_pad, c1), lambda i: (0, 0, 0)),  # [hW | 1] bf16 (resident)
                pl.BlockSpec((1, hc), lambda i: (0, 0))]                # bias
    args = [adj_bias, alpha_src_t, alpha_dst, hw_aug, bias]
    if add_residual:
        in_specs.append(pl.BlockSpec((tile_m, hc), lambda i: (i, 0)))
        args.append(residual)

    return pl.pallas_call(
        kernel,
        grid=(n_pad // tile_m,),
        in_specs=in_specs,
        out_specs=pl.BlockSpec((tile_m, hc), lambda i: (i, 0)),
        out_shape=jax.ShapeDtypeStruct((n_pad, hc), jnp.float32),
        compiler_params=pltpu.CompilerParams(
            dimension_semantics=("parallel",), vmem_limit_bytes=vmem_budget),
    )(*args)


# --------------------------------------------------------------------------------------
# Wrapper / parameter prep (plain JAX glue).
# --------------------------------------------------------------------------------------
def _att_cat_t(att_src, att_dst, heads, out_ch):
    """Block-structured (heads*out_ch, 2*heads) matrix so alpha = hW @ att_cat_t."""
    hc = heads * out_ch
    m = jnp.zeros((2 * heads, hc), jnp.float32)
    for k in range(heads):
        m = m.at[k, k * out_ch:(k + 1) * out_ch].set(att_src[k])
        m = m.at[heads + k, k * out_ch:(k + 1) * out_ch].set(att_dst[k])
    return m.T


def build_adj_bias(edge_index, n_pad):
    """Dense additive attention-mask bias in bf16: 0 where edge src->dst exists (indexed
    [dst, src]) or on the diagonal (add_self_loops), -1e30 elsewhere."""
    src, dst = edge_index[0], edge_index[1]
    bias = jnp.full((n_pad, n_pad), _NEG_BIG, jnp.float32)
    bias = bias.at[dst, src].set(0.0)
    diag = jnp.arange(n_pad)
    bias = bias.at[diag, diag].set(0.0)        # self loops keep every row-softmax finite
    return bias.astype(jnp.bfloat16)


def skipgat_forward(x, edge_index, params, *, heads, hidden_features):
    n, in_features = x.shape
    out_ch2 = in_features // heads             # residual assumes in_features % heads == 0

    vmem_budget = _vmem_budget_bytes()
    tile_m, n_pad = _choose_tiling(n, vmem_budget)

    adj_bias = build_adj_bias(edge_index, n_pad)
    x_pad = jnp.pad(x, ((0, n_pad - n), (0, 0)))

    att1_t = _att_cat_t(params["att_src1"], params["att_dst1"], heads, hidden_features)
    att2_t = _att_cat_t(params["att_src2"], params["att_dst2"], heads, out_ch2)

    h1 = _gat_layer(x_pad, adj_bias, None, params["w1"], att1_t, params["b1"],
                    heads=heads, out_ch=hidden_features, tile_m=tile_m,
                    vmem_budget=vmem_budget)                               # relu1 + conv1
    out = _gat_layer(h1, adj_bias, x_pad, params["w2"], att2_t, params["b2"],
                     heads=heads, out_ch=out_ch2, tile_m=tile_m,
                     vmem_budget=vmem_budget)                              # relu2 + conv2 + x
    return out[:n]


# --------------------------------------------------------------------------------------
# Pure-JAX reference (loose check; kernel uses bf16 aggregation + approx reciprocal).
# --------------------------------------------------------------------------------------
def _reference(x, edge_index, params, *, heads, hidden_features):
    n = x.shape[0]
    src, dst = edge_index[0], edge_index[1]
    adj = jnp.zeros((n, n), jnp.float32).at[dst, src].set(1.0)
    adj = adj.at[jnp.arange(n), jnp.arange(n)].set(1.0)

    def layer(h, w, a_s, a_d, b, out_ch):
        h = jnp.maximum(h, 0.0)
        hw = h @ w
        outs = []
        for k in range(heads):
            hk = hw[:, k * out_ch:(k + 1) * out_ch]
            asr = (hk * a_s[k]).sum(-1)
            ads = (hk * a_d[k]).sum(-1)
            e = ads[:, None] + asr[None, :]
            e = jnp.where(e > 0, e, 0.2 * e)
            e = jnp.where(adj > 0, e, -jnp.inf)
            p = jax.nn.softmax(e, axis=1)
            outs.append(p @ hk)
        return jnp.concatenate(outs, axis=1) + b

    h1 = layer(x, params["w1"], params["att_src1"], params["att_dst1"],
               params["b1"], hidden_features)
    out = layer(h1, params["w2"], params["att_src2"], params["att_dst2"],
                params["b2"], x.shape[1] // heads)
    return out + x


if __name__ == "__main__":
    # Small shapes consistent with the module (in_features divisible by heads so the
    # residual type-checks); N chosen so the row-tiled grid path is exercised.
    N = 384
    IN_FEATURES = 8
    HIDDEN = 16
    HEADS = 2

    key = jax.random.PRNGKey(0)
    keys = jax.random.split(key, 12)

    x = jax.random.normal(keys[0], (N, IN_FEATURES), jnp.float32)

    # Bidirectional ring graph: edge_index shape (2, 2N)
    idx = jnp.arange(N)
    src = jnp.concatenate([idx, (idx + 1) % N])
    dst = jnp.concatenate([(idx + 1) % N, idx])
    edge_index = jnp.stack([src, dst], axis=0)
    edge_weight = jax.random.uniform(keys[1], (edge_index.shape[1],), jnp.float32)
    # edge_weight is accepted by the torch module but ignored by GATConv (edge_dim=None).

    out_ch2 = IN_FEATURES // HEADS
    s = 0.1
    params = {
        "w1":       s * jax.random.normal(keys[2], (IN_FEATURES, HEADS * HIDDEN), jnp.float32),
        "att_src1": s * jax.random.normal(keys[3], (HEADS, HIDDEN), jnp.float32),
        "att_dst1": s * jax.random.normal(keys[4], (HEADS, HIDDEN), jnp.float32),
        "b1":       s * jax.random.normal(keys[5], (1, HEADS * HIDDEN), jnp.float32),
        "w2":       s * jax.random.normal(keys[6], (HEADS * HIDDEN, HEADS * out_ch2), jnp.float32),
        "att_src2": s * jax.random.normal(keys[7], (HEADS, out_ch2), jnp.float32),
        "att_dst2": s * jax.random.normal(keys[8], (HEADS, out_ch2), jnp.float32),
        "b2":       s * jax.random.normal(keys[9], (1, HEADS * out_ch2), jnp.float32),
    }

    out = skipgat_forward(x, edge_index, params, heads=HEADS, hidden_features=HIDDEN)
    out = jax.block_until_ready(out)
    assert out.shape == (N, IN_FEATURES) and out.dtype == jnp.float32
    assert bool(jnp.all(jnp.isfinite(out)))

    # Loose tolerance: intentional precision tradeoff — bf16 attention weights / hW in the
    # aggregation matmul (f32 accumulate) and approx-reciprocal softmax normalization.
    ref = _reference(x, edge_index, params, heads=HEADS, hidden_features=HIDDEN)
    assert bool(jnp.allclose(out, ref, atol=3e-2, rtol=3e-2))

    print("KERNEL_OK")
</pallas_src>

<mosaic_0001>
module attributes {stable_mosaic.version = 11 : i64} {
  func.func @gat_project_kernel(%arg0: i32, %arg1: memref<384x8xf32, #tpu.memory_space<vmem>>, %arg2: memref<8x32xf32, #tpu.memory_space<vmem>>, %arg3: memref<32x4xf32, #tpu.memory_space<vmem>>, %arg4: memref<384x32xbf16, #tpu.memory_space<vmem>>, %arg5: memref<384x4xf32, #tpu.memory_space<vmem>>) attributes {dimension_semantics = [#tpu.dimension_semantics<arbitrary>], iteration_bounds = array<i64: 1>, scalar_prefetch = 0 : i64, scratch_operands = 0 : i64, tpu.core_type = #tpu.core_type<tc>, window_params = [{pipeline_mode = #tpu.pipeline_mode<synchronous>, transform_indices = @transform_0, window_bounds = array<i64: 384, 8>}, {pipeline_mode = #tpu.pipeline_mode<synchronous>, transform_indices = @transform_1, window_bounds = array<i64: 8, 32>}, {pipeline_mode = #tpu.pipeline_mode<synchronous>, transform_indices = @transform_2, window_bounds = array<i64: 32, 4>}, {pipeline_mode = #tpu.pipeline_mode<synchronous>, transform_indices = @transform_3, window_bounds = array<i64: 384, 32>}, {pipeline_mode = #tpu.pipeline_mode<synchronous>, transform_indices = @transform_4, window_bounds = array<i64: 384, 4>}]} {
    %c0 = arith.constant 0 : index
    %c0_0 = arith.constant 0 : index
    %0 = vector.load %arg1[%c0, %c0_0] : memref<384x8xf32, #tpu.memory_space<vmem>>, vector<384x8xf32>
    %cst = arith.constant 0.000000e+00 : f32
    %1 = vector.broadcast %cst : f32 to vector<384x8xf32>
    %2 = arith.maximumf %0, %1 : vector<384x8xf32>
    %c0_1 = arith.constant 0 : index
    %c0_2 = arith.constant 0 : index
    %3 = vector.load %arg2[%c0_1, %c0_2] : memref<8x32xf32, #tpu.memory_space<vmem>>, vector<8x32xf32>
    %cst_3 = arith.constant dense<0.000000e+00> : vector<384x32xf32>
    %4 = tpu.matmul %2, %3, %cst_3 {dimension_numbers = #tpu.dot_dimension_numbers<[1], [0], [0], [1], [0, 0, 1, 1], [], []>} : vector<384x8xf32>, vector<8x32xf32>, vector<384x32xf32> -> vector<384x32xf32>
    %5 = arith.truncf %4 : vector<384x32xf32> to vector<384x32xbf16>
    %c0_4 = arith.constant 0 : index
    %c0_5 = arith.constant 0 : index
    %6 = vector.load %arg4[%c0_4, %c0_5] : memref<384x32xbf16, #tpu.memory_space<vmem>>, vector<384x32xbf16>
    tpu.vector_store %arg4[%c0_4, %c0_5], %5 {strides = array<i32>} : memref<384x32xbf16, #tpu.memory_space<vmem>>, vector<384x32xbf16>,
    %c0_6 = arith.constant 0 : index
    %c0_7 = arith.constant 0 : index
    %7 = vector.load %arg3[%c0_6, %c0_7] : memref<32x4xf32, #tpu.memory_space<vmem>>, vector<32x4xf32>
    %cst_8 = arith.constant dense<0.000000e+00> : vector<384x4xf32>
    %8 = tpu.matmul %4, %7, %cst_8 {dimension_numbers = #tpu.dot_dimension_numbers<[1], [0], [0], [1], [0, 0, 1, 1], [], []>} : vector<384x32xf32>, vector<32x4xf32>, vector<384x4xf32> -> vector<384x4xf32>
    %c0_9 = arith.constant 0 : index
    %c0_10 = arith.constant 0 : index
    %9 = vector.load %arg5[%c0_9, %c0_10] : memref<384x4xf32, #tpu.memory_space<vmem>>, vector<384x4xf32>
    tpu.vector_store %arg5[%c0_9, %c0_10], %8 {strides = array<i32>} : memref<384x4xf32, #tpu.memory_space<vmem>>, vector<384x4xf32>,
    return
  }
  func.func @transform_0(%arg0: i32) -> (i32, i32) {
    %c0_i32 = arith.constant 0 : i32
    %c0_i32_0 = arith.constant 0 : i32
    %c0_i32_1 = arith.constant 0 : i32
    return %c0_i32, %c0_i32_0 : i32, i32
  }
  func.func @transform_1(%arg0: i32) -> (i32, i32) {
    %c0_i32 = arith.constant 0 : i32
    %c0_i32_0 = arith.constant 0 : i32
    %c0_i32_1 = arith.constant 0 : i32
    return %c0_i32, %c0_i32_0 : i32, i32
  }
  func.func @transform_2(%arg0: i32) -> (i32, i32) {
    %c0_i32 = arith.constant 0 : i32
    %c0_i32_0 = arith.constant 0 : i32
    %c0_i32_1 = arith.constant 0 : i32
    return %c0_i32, %c0_i32_0 : i32, i32
  }
  func.func @transform_3(%arg0: i32) -> (i32, i32) {
    %c0_i32 = arith.constant 0 : i32
    %c0_i32_0 = arith.constant 0 : i32
    %c0_i32_1 = arith.constant 0 : i32
    return %c0_i32, %c0_i32_0 : i32, i32
  }
  func.func @transform_4(%arg0: i32) -> (i32, i32) {
    %c0_i32 = arith.constant 0 : i32
    %c0_i32_0 = arith.constant 0 : i32
    %c0_i32_1 = arith.constant 0 : i32
    return %c0_i32, %c0_i32_0 : i32, i32
  }
}

</mosaic_0001>

<llo_original>
// kernel: tpu_custom_call.1
$region0: #{tpu_custom_call.1}
  #allocation0 [shape = 'u32[]', space=smem, size = 0x4, offset = 0x4, fixed_abs, tag = 'smem constant byte address 0x4 - core index']
  #allocation1 [shape = 'u32[144,128]{1,0:T(1,128)}', space=vmem, size = 0x12000, scoped, tag = 'internal scratch']
  %s0 = inlined_call_operand.vmem [shape: f32[384,8], index: 0, kind: input, shape index: {}]
  %s1 = inlined_call_operand.vmem [shape: f32[8,32], index: 1, kind: input, shape index: {}]
  %s2 = inlined_call_operand.vmem [shape: f32[32,4], index: 2, kind: input, shape index: {}]
  %s3 = inlined_call_operand.vmem [shape: bf16[384,32], index: 3, kind: output, shape index: {0}]
  %s4 = inlined_call_operand.vmem [shape: f32[384,4], index: 4, kind: output, shape index: {1}]
  %5 = xla_tuple %s3, %s4
  %s6 = sld [smem:[#allocation0]]
  $region30: #{tpu_custom_call.1} parent=0
    _
  %s8 = ssub.s32 1, %s6
  %s9 = scalar_select 0, %s8, %s6
  // Predicated region
  $region2: #{tpu_custom_call.1} parent=0 // pred_check
    _
  $region3: #{tpu_custom_call.1} parent=0 // pred_check_branch
    %11 = sbr.rel (0) target = $region5
  $region4: #{tpu_custom_call.1} parent=0 // pred_region
    _
  $region5: #{tpu_custom_call.1} parent=0 // pred_fallthru
    _
  // Predicated region
  $region6: #{tpu_custom_call.1} parent=0 // pred_check
    _
  $region7: #{tpu_custom_call.1} parent=0 // pred_check_branch
    %13 = sbr.rel (0) target = $region9
  $region8: #{tpu_custom_call.1} parent=0 // pred_region
    _
  $region9: #{tpu_custom_call.1} parent=0 // pred_fallthru
    _
  // Predicated region
  $region10: #{tpu_custom_call.1} parent=0 // pred_check
    _
  $region11: #{tpu_custom_call.1} parent=0 // pred_check_branch
    %15 = sbr.rel (0) target = $region13
  $region12: #{tpu_custom_call.1} parent=0 // pred_region
    _
  $region13: #{tpu_custom_call.1} parent=0 // pred_fallthru
    _
  %v16 = vld [vmem:[%s0] sm:$0xff]
  %v17 = vld [vmem:[%s0 + $0x8] sm:$0xff]
  %v18 = vld [vmem:[%s0 + $0x10] sm:$0xff]
  %v19 = vld [vmem:[%s0 + $0x18] sm:$0xff]
  %v20 = vld [vmem:[%s0 + $0x20] sm:$0xff]
  %v21 = vld [vmem:[%s0 + $0x28] sm:$0xff]
  %v22 = vld [vmem:[%s0 + $0x30] sm:$0xff]
  %v23 = vld [vmem:[%s0 + $0x38] sm:$0xff]
  %v24 = vld [vmem:[%s0 + $0x40] sm:$0xff]
  %v25 = vld [vmem:[%s0 + $0x48] sm:$0xff]
  %v26 = vld [vmem:[%s0 + $0x50] sm:$0xff]
  %v27 = vld [vmem:[%s0 + $0x58] sm:$0xff]
  %v28 = vld [vmem:[%s0 + $0x60] sm:$0xff]
  %v29 = vld [vmem:[%s0 + $0x68] sm:$0xff]
  %v30 = vld [vmem:[%s0 + $0x70] sm:$0xff]
  %v31 = vld [vmem:[%s0 + $0x78] sm:$0xff]
  %v32 = vld [vmem:[%s0 + $0x80] sm:$0xff]
  %v33 = vld [vmem:[%s0 + $0x88] sm:$0xff]
  %v34 = vld [vmem:[%s0 + $0x90] sm:$0xff]
  %v35 = vld [vmem:[%s0 + $0x98] sm:$0xff]
  %v36 = vld [vmem:[%s0 + $0xa0] sm:$0xff]
  %v37 = vld [vmem:[%s0 + $0xa8] sm:$0xff]
  %v38 = vld [vmem:[%s0 + $0xb0] sm:$0xff]
  %v39 = vld [vmem:[%s0 + $0xb8] sm:$0xff]
  %v40 = vld [vmem:[%s0 + $0xc0] sm:$0xff]
  %v41 = vld [vmem:[%s0 + $0xc8] sm:$0xff]
  %v42 = vld [vmem:[%s0 + $0xd0] sm:$0xff]
  %v43 = vld [vmem:[%s0 + $0xd8] sm:$0xff]
  %v44 = vld [vmem:[%s0 + $0xe0] sm:$0xff]
  %v45 = vld [vmem:[%s0 + $0xe8] sm:$0xff]
  %v46 = vld [vmem:[%s0 + $0xf0] sm:$0xff]
  %v47 = vld [vmem:[%s0 + $0xf8] sm:$0xff]
  %v48 = vld [vmem:[%s0 + $0x100] sm:$0xff]
  %v49 = vld [vmem:[%s0 + $0x108] sm:$0xff]
  %v50 = vld [vmem:[%s0 + $0x110] sm:$0xff]
  %v51 = vld [vmem:[%s0 + $0x118] sm:$0xff]
  %v52 = vld [vmem:[%s0 + $0x120] sm:$0xff]
  %v53 = vld [vmem:[%s0 + $0x128] sm:$0xff]
  %v54 = vld [vmem:[%s0 + $0x130] sm:$0xff]
  %v55 = vld [vmem:[%s0 + $0x138] sm:$0xff]
  %v56 = vld [vmem:[%s0 + $0x140] sm:$0xff]
  %v57 = vld [vmem:[%s0 + $0x148] sm:$0xff]
  %v58 = vld [vmem:[%s0 + $0x150] sm:$0xff]
  %v59 = vld [vmem:[%s0 + $0x158] sm:$0xff]
  %v60 = vld [vmem:[%s0 + $0x160] sm:$0xff]
  %v61 = vld [vmem:[%s0 + $0x168] sm:$0xff]
  %v62 = vld [vmem:[%s0 + $0x170] sm:$0xff]
  %v63 = vld [vmem:[%s0 + $0x178] sm:$0xff]
  %v64 = vmax.f32 %v16, 0.0
  %v65 = vmax.f32 %v17, 0.0
  %v66 = vmax.f32 %v18, 0.0
  %v67 = vmax.f32 %v19, 0.0
  %v68 = vmax.f32 %v20, 0.0
  %v69 = vmax.f32 %v21, 0.0
  %v70 = vmax.f32 %v22, 0.0
  %v71 = vmax.f32 %v23, 0.0
  %v72 = vmax.f32 %v24, 0.0
  %v73 = vmax.f32 %v25, 0.0
  %v74 = vmax.f32 %v26, 0.0
  %v75 = vmax.f32 %v27, 0.0
  %v76 = vmax.f32 %v28, 0.0
  %v77 = vmax.f32 %v29, 0.0
  %v78 = vmax.f32 %v30, 0.0
  %v79 = vmax.f32 %v31, 0.0
  %v80 = vmax.f32 %v32, 0.0
  %v81 = vmax.f32 %v33, 0.0
  %v82 = vmax.f32 %v34, 0.0
  %v83 = vmax.f32 %v35, 0.0
  %v84 = vmax.f32 %v36, 0.0
  %v85 = vmax.f32 %v37, 0.0
  %v86 = vmax.f32 %v38, 0.0
  %v87 = vmax.f32 %v39, 0.0
  %v88 = vmax.f32 %v40, 0.0
  %v89 = vmax.f32 %v41, 0.0
  %v90 = vmax.f32 %v42, 0.0
  %v91 = vmax.f32 %v43, 0.0
  %v92 = vmax.f32 %v44, 0.0
  %v93 = vmax.f32 %v45, 0.0
  %v94 = vmax.f32 %v46, 0.0
  %v95 = vmax.f32 %v47, 0.0
  %v96 = vmax.f32 %v48, 0.0
  %v97 = vmax.f32 %v49, 0.0
  %v98 = vmax.f32 %v50, 0.0
  %v99 = vmax.f32 %v51, 0.0
  %v100 = vmax.f32 %v52, 0.0
  %v101 = vmax.f32 %v53, 0.0
  %v102 = vmax.f32 %v54, 0.0
  %v103 = vmax.f32 %v55, 0.0
  %v104 = vmax.f32 %v56, 0.0
  %v105 = vmax.f32 %v57, 0.0
  %v106 = vmax.f32 %v58, 0.0
  %v107 = vmax.f32 %v59, 0.0
  %v108 = vmax.f32 %v60, 0.0
  %v109 = vmax.f32 %v61, 0.0
  %v110 = vmax.f32 %v62, 0.0
  %v111 = vmax.f32 %v63, 0.0
  %v112 = vld [vmem:[%s1] sm:$0xff]
  %vm113 = vcmask 64512
  %v115 = vsel %vm113, %v64, 0
  %v118 = vsel %vm113, %v65, 0
  %v121 = vsel %vm113, %v66, 0
  %v124 = vsel %vm113, %v67, 0
  %v127 = vsel %vm113, %v68, 0
  %v130 = vsel %vm113, %v69, 0
  %v133 = vsel %vm113, %v70, 0
  %v136 = vsel %vm113, %v71, 0
  %v139 = vsel %vm113, %v72, 0
  %v142 = vsel %vm113, %v73, 0
  %v145 = vsel %vm113, %v74, 0
  %v148 = vsel %vm113, %v75, 0
  %v151 = vsel %vm113, %v76, 0
  %v154 = vsel %vm113, %v77, 0
  %v157 = vsel %vm113, %v78, 0
  %v160 = vsel %vm113, %v79, 0
  %v163 = vsel %vm113, %v80, 0
  %v166 = vsel %vm113, %v81, 0
  %v169 = vsel %vm113, %v82, 0
  %v172 = vsel %vm113, %v83, 0
  %v175 = vsel %vm113, %v84, 0
  %v178 = vsel %vm113, %v85, 0
  %v181 = vsel %vm113, %v86, 0
  %v184 = vsel %vm113, %v87, 0
  %v187 = vsel %vm113, %v88, 0
  %v190 = vsel %vm113, %v89, 0
  %v193 = vsel %vm113, %v90, 0
  %v196 = vsel %vm113, %v91, 0
  %v199 = vsel %vm113, %v92, 0
  %v202 = vsel %vm113, %v93, 0
  %v205 = vsel %vm113, %v94, 0
  %v208 = vsel %vm113, %v95, 0
  %v211 = vsel %vm113, %v96, 0
  %v214 = vsel %vm113, %v97, 0
  %v217 = vsel %vm113, %v98, 0
  %v220 = vsel %vm113, %v99, 0
  %v223 = vsel %vm113, %v100, 0
  %v226 = vsel %vm113, %v101, 0
  %v229 = vsel %vm113, %v102, 0
  %v232 = vsel %vm113, %v103, 0
  %v235 = vsel %vm113, %v104, 0
  %v238 = vsel %vm113, %v105, 0
  %v241 = vsel %vm113, %v106, 0
  %v244 = vsel %vm113, %v107, 0
  %v247 = vsel %vm113, %v108, 0
  %v250 = vsel %vm113, %v109, 0
  %v253 = vsel %vm113, %v110, 0
  %v256 = vsel %vm113, %v111, 0
  %258 = vmatprep.subr.mxu0 0.0
  %259 = vmatpush1.msra.mxu0 0.0
  %260 = vmatprep.subr.mxu0 0.0
  %261 = vmatpush1.msra.mxu0 0.0
  %262 = vmatprep.subr.mxu0 0.0
  %263 = vmatpush1.msra.mxu0 0.0
  %264 = vmatprep.subr.mxu0 0.0
  %265 = vmatpush1.msra.mxu0 0.0
  %266 = vmatprep.subr.mxu0 0.0
  %267 = vmatpush1.msra.mxu0 0.0
  %268 = vmatprep.subr.mxu0 0.0
  %269 = vmatpush1.msra.mxu0 0.0
  %270 = vmatprep.subr.mxu0 0.0
  %271 = vmatpush1.msra.mxu0 0.0
  %272 = vmatprep.subr.mxu0 0.0
  %273 = vmatpush1.msra.mxu0 0.0
  %274 = vmatprep.subr.mxu0 0.0
  %275 = vmatpush1.msra.mxu0 0.0
  %276 = vmatprep.subr.mxu0 0.0
  %277 = vmatpush1.msra.mxu0 0.0
  %278 = vmatprep.subr.mxu0 0.0
  %279 = vmatpush1.msra.mxu0 0.0
  %280 = vmatprep.subr.mxu0 0.0
  %281 = vmatpush1.msra.mxu0 0.0
  %282 = vmatprep.subr.mxu0 0.0
  %283 = vmatpush1.msra.mxu0 0.0
  %284 = vmatprep.subr.mxu0 0.0
  %285 = vmatpush1.msra.mxu0 0.0
  %286 = vmatprep.subr.mxu0 0.0
  %287 = vmatpush1.msra.mxu0 0.0
  %288 = vmatprep.subr.mxu0 0.0
  %289 = vmatpush1.msra.mxu0 %v112
  %290 = vmatprep.subr.mxu0 0.0
  %291 = vmatpush2.msra.mxu0 0.0
  %292 = vmatprep.subr.mxu0 0.0
  %293 = vmatpush2.msra.mxu0 0.0
  %294 = vmatprep.subr.mxu0 0.0
  %295 = vmatpush2.msra.mxu0 0.0
  %296 = vmatprep.subr.mxu0 0.0
  %297 = vmatpush2.msra.mxu0 0.0
  %298 = vmatprep.subr.mxu0 0.0
  %299 = vmatpush2.msra.mxu0 0.0
  %300 = vmatprep.subr.mxu0 0.0
  %301 = vmatpush2.msra.mxu0 0.0
  %302 = vmatprep.subr.mxu0 0.0
  %303 = vmatpush2.msra.mxu0 0.0
  %304 = vmatprep.subr.mxu0 0.0
  %305 = vmatpush2.msra.mxu0 0.0
  %306 = vmatprep.subr.mxu0 0.0
  %307 = vmatpush2.msra.mxu0 0.0
  %308 = vmatprep.subr.mxu0 0.0
  %309 = vmatpush2.msra.mxu0 0.0
  %310 = vmatprep.subr.mxu0 0.0
  %311 = vmatpush2.msra.mxu0 0.0
  %312 = vmatprep.subr.mxu0 0.0
  %313 = vmatpush2.msra.mxu0 0.0
  %314 = vmatprep.subr.mxu0 0.0
  %315 = vmatpush2.msra.mxu0 0.0
  %316 = vmatprep.subr.mxu0 0.0
  %317 = vmatpush2.msra.mxu0 0.0
  %318 = vmatprep.subr.mxu0 0.0
  %319 = vmatpush2.msra.mxu0 0.0
  %320 = vmatprep.subr.mxu0 0.0
  %321 = vmatpush2.msra.mxu0 0.0
  %322 = vmatprep.mubr.f32.mxu0 0.0
  %323 = vmatmul.mubr.f32.gmra.mxu0 %v115
  %v324 = vpop.f32.mrf.mxu0
  %v325 = vadd.f32 0.0, %v324
  %v326 = vpop.f32.mrf.mxu0
  %327 = vmatprep.mubr.f32.mxu0 0.0
  %328 = vmatmul.mubr.f32.gmra.mxu0 %v118
  %v329 = vpop.f32.mrf.mxu0
  %v330 = vadd.f32 0.0, %v329
  %v331 = vpop.f32.mrf.mxu0
  %332 = vmatprep.mubr.f32.mxu0 0.0
  %333 = vmatmul.mubr.f32.gmra.mxu0 %v121
  %v334 = vpop.f32.mrf.mxu0
  %v335 = vadd.f32 0.0, %v334
  %v336 = vpop.f32.mrf.mxu0
  %337 = vmatprep.mubr.f32.mxu0 0.0
  %338 = vmatmul.mubr.f32.gmra.mxu0 %v124
  %v339 = vpop.f32.mrf.mxu0
  %v340 = vadd.f32 0.0, %v339
  %v341 = vpop.f32.mrf.mxu0
  %342 = vmatprep.mubr.f32.mxu0 0.0
  %343 = vmatmul.mubr.f32.gmra.mxu0 %v127
  %v344 = vpop.f32.mrf.mxu0
  %v345 = vadd.f32 0.0, %v344
  %v346 = vpop.f32.mrf.mxu0
  %347 = vmatprep.mubr.f32.mxu0 0.0
  %348 = vmatmul.mubr.f32.gmra.mxu0 %v130
  %v349 = vpop.f32.mrf.mxu0
  %v350 = vadd.f32 0.0, %v349
  %v351 = vpop.f32.mrf.mxu0
  %352 = vmatprep.mubr.f32.mxu0 0.0
  %353 = vmatmul.mubr.f32.gmra.mxu0 %v133
  %v354 = vpop.f32.mrf.mxu0
  %v355 = vadd.f32 0.0, %v354
  %v356 = vpop.f32.mrf.mxu0
  %357 = vmatprep.mubr.f32.mxu0 0.0
  %358 = vmatmul.mubr.f32.gmra.mxu0 %v136
  %v359 = vpop.f32.mrf.mxu0
  %v360 = vadd.f32 0.0, %v359
  %v361 = vpop.f32.mrf.mxu0
  %362 = vmatprep.mubr.f32.mxu0 0.0
  %363 = vmatmul.mubr.f32.gmra.mxu0 %v139
  %v364 = vpop.f32.mrf.mxu0
  %v365 = vadd.f32 0.0, %v364
  %v366 = vpop.f32.mrf.mxu0
  %367 = vmatprep.mubr.f32.mxu0 0.0
  %368 = vmatmul.mubr.f32.gmra.mxu0 %v142
  %v369 = vpop.f32.mrf.mxu0
  %v370 = vadd.f32 0.0, %v369
  %v371 = vpop.f32.mrf.mxu0
  %372 = vmatprep.mubr.f32.mxu0 0.0
  %373 = vmatmul.mubr.f32.gmra.mxu0 %v145
  %v374 = vpop.f32.mrf.mxu0
  %v375 = vadd.f32 0.0, %v374
  %v376 = vpop.f32.mrf.mxu0
  %377 = vmatprep.mubr.f32.mxu0 0.0
  %378 = vmatmul.mubr.f32.gmra.mxu0 %v148
  %v379 = vpop.f32.mrf.mxu0
  %v380 = vadd.f32 0.0, %v379
  %v381 = vpop.f32.mrf.mxu0
  %382 = vmatprep.mubr.f32.mxu0 0.0
  %383 = vmatmul.mubr.f32.gmra.mxu0 %v151
  %v384 = vpop.f32.mrf.mxu0
  %v385 = vadd.f32 0.0, %v384
  %v386 = vpop.f32.mrf.mxu0
  %387 = vmatprep.mubr.f32.mxu0 0.0
  %388 = vmatmul.mubr.f32.gmra.mxu0 %v154
  %v389 = vpop.f32.mrf.mxu0
  %v390 = vadd.f32 0.0, %v389
  %v391 = vpop.f32.mrf.mxu0
  %392 = vmatprep.mubr.f32.mxu0 0.0
  %393 = vmatmul.mubr.f32.gmra.mxu0 %v157
  %v394 = vpop.f32.mrf.mxu0
  %v395 = vadd.f32 0.0, %v394
  %v396 = vpop.f32.mrf.mxu0
  %397 = vmatprep.mubr.f32.mxu0 0.0
  %398 = vmatmul.mubr.f32.gmra.mxu0 %v160
  %v399 = vpop.f32.mrf.mxu0
  %v400 = vadd.f32 0.0, %v399
  %v401 = vpop.f32.mrf.mxu0
  %402 = vmatprep.mubr.f32.mxu0 0.0
  %403 = vmatmul.mubr.f32.gmra.mxu0 %v163
  %v404 = vpop.f32.mrf.mxu0
  %v405 = vadd.f32 0.0, %v404
  %v406 = vpop.f32.mrf.mxu0
  %407 = vmatprep.mubr.f32.mxu0 0.0
  %408 = vmatmul.mubr.f32.gmra.mxu0 %v166
  %v409 = vpop.f32.mrf.mxu0
  %v410 = vadd.f32 0.0, %v409
  %v411 = vpop.f32.mrf.mxu0
  %412 = vmatprep.mubr.f32.mxu0 0.0
  %413 = vmatmul.mubr.f32.gmra.mxu0 %v169
  %v414 = vpop.f32.mrf.mxu0
  %v415 = vadd.f32 0.0, %v414
  %v416 = vpop.f32.mrf.mxu0
  %417 = vmatprep.mubr.f32.mxu0 0.0
  %418 = vmatmul.mubr.f32.gmra.mxu0 %v172
  %v419 = vpop.f32.mrf.mxu0
  %v420 = vadd.f32 0.0, %v419
  %v421 = vpop.f32.mrf.mxu0
  %422 = vmatprep.mubr.f32.mxu0 0.0
  %423 = vmatmul.mubr.f32.gmra.mxu0 %v175
  %v424 = vpop.f32.mrf.mxu0
  %v425 = vadd.f32 0.0, %v424
  %v426 = vpop.f32.mrf.mxu0
  %427 = vmatprep.mubr.f32.mxu0 0.0
  %428 = vmatmul.mubr.f32.gmra.mxu0 %v178
  %v429 = vpop.f32.mrf.mxu0
  %v430 = vadd.f32 0.0, %v429
  %v431 = vpop.f32.mrf.mxu0
  %432 = vmatprep.mubr.f32.mxu0 0.0
  %433 = vmatmul.mubr.f32.gmra.mxu0 %v181
  %v434 = vpop.f32.mrf.mxu0
  %v435 = vadd.f32 0.0, %v434
  %v436 = vpop.f32.mrf.mxu0
  %437 = vmatprep.mubr.f32.mxu0 0.0
  %438 = vmatmul.mubr.f32.gmra.mxu0 %v184
  %v439 = vpop.f32.mrf.mxu0
  %v440 = vadd.f32 0.0, %v439
  %v441 = vpop.f32.mrf.mxu0
  %442 = vmatprep.mubr.f32.mxu0 0.0
  %443 = vmatmul.mubr.f32.gmra.mxu0 %v187
  %v444 = vpop.f32.mrf.mxu0
  %v445 = vadd.f32 0.0, %v444
  %v446 = vpop.f32.mrf.mxu0
  %447 = vmatprep.mubr.f32.mxu0 0.0
  %448 = vmatmul.mubr.f32.gmra.mxu0 %v190
  %v449 = vpop.f32.mrf.mxu0
  %v450 = vadd.f32 0.0, %v449
  %v451 = vpop.f32.mrf.mxu0
  %452 = vmatprep.mubr.f32.mxu0 0.0
  %453 = vmatmul.mubr.f32.gmra.mxu0 %v193
  %v454 = vpop.f32.mrf.mxu0
  %v455 = vadd.f32 0.0, %v454
  %v456 = vpop.f32.mrf.mxu0
  %457 = vmatprep.mubr.f32.mxu0 0.0
  %458 = vmatmul.mubr.f32.gmra.mxu0 %v196
  %v459 = vpop.f32.mrf.mxu0
  %v460 = vadd.f32 0.0, %v459
  %v461 = vpop.f32.mrf.mxu0
  %462 = vmatprep.mubr.f32.mxu0 0.0
  %463 = vmatmul.mubr.f32.gmra.mxu0 %v199
  %v464 = vpop.f32.mrf.mxu0
  %v465 = vadd.f32 0.0, %v464
  %v466 = vpop.f32.mrf.mxu0
  %467 = vmatprep.mubr.f32.mxu0 0.0
  %468 = vmatmul.mubr.f32.gmra.mxu0 %v202
  %v469 = vpop.f32.mrf.mxu0
  %v470 = vadd.f32 0.0, %v469
  %v471 = vpop.f32.mrf.mxu0
  %472 = vmatprep.mubr.f32.mxu0 0.0
  %473 = vmatmul.mubr.f32.gmra.mxu0 %v205
  %v474 = vpop.f32.mrf.mxu0
  %v475 = vadd.f32 0.0, %v474
  %v476 = vpop.f32.mrf.mxu0
  %477 = vmatprep.mubr.f32.mxu0 0.0
  %478 = vmatmul.mubr.f32.gmra.mxu0 %v208
  %v479 = vpop.f32.mrf.mxu0
  %v480 = vadd.f32 0.0, %v479
  %v481 = vpop.f32.mrf.mxu0
  %482 = vmatprep.mubr.f32.mxu0 0.0
  %483 = vmatmul.mubr.f32.gmra.mxu0 %v211
  %v484 = vpop.f32.mrf.mxu0
  %v485 = vadd.f32 0.0, %v484
  %v486 = vpop.f32.mrf.mxu0
  %487 = vmatprep.mubr.f32.mxu0 0.0
  %488 = vmatmul.mubr.f32.gmra.mxu0 %v214
  %v489 = vpop.f32.mrf.mxu0
  %v490 = vadd.f32 0.0, %v489
  %v491 = vpop.f32.mrf.mxu0
  %492 = vmatprep.mubr.f32.mxu0 0.0
  %493 = vmatmul.mubr.f32.gmra.mxu0 %v217
  %v494 = vpop.f32.mrf.mxu0
  %v495 = vadd.f32 0.0, %v494
  %v496 = vpop.f32.mrf.mxu0
  %497 = vmatprep.mubr.f32.mxu0 0.0
  %498 = vmatmul.mubr.f32.gmra.mxu0 %v220
  %v499 = vpop.f32.mrf.mxu0
  %v500 = vadd.f32 0.0, %v499
  %v501 = vpop.f32.mrf.mxu0
  %502 = vmatprep.mubr.f32.mxu0 0.0
  %503 = vmatmul.mubr.f32.gmra.mxu0 %v223
  %v504 = vpop.f32.mrf.mxu0
  %v505 = vadd.f32 0.0, %v504
  %v506 = vpop.f32.mrf.mxu0
  %507 = vmatprep.mubr.f32.mxu0 0.0
  %508 = vmatmul.mubr.f32.gmra.mxu0 %v226
  %v509 = vpop.f32.mrf.mxu0
  %v510 = vadd.f32 0.0, %v509
  %v511 = vpop.f32.mrf.mxu0
  %512 = vmatprep.mubr.f32.mxu0 0.0
  %513 = vmatmul.mubr.f32.gmra.mxu0 %v229
  %v514 = vpop.f32.mrf.mxu0
  %v515 = vadd.f32 0.0, %v514
  %v516 = vpop.f32.mrf.mxu0
  %517 = vmatprep.mubr.f32.mxu0 0.0
  %518 = vmatmul.mubr.f32.gmra.mxu0 %v232
  %v519 = vpop.f32.mrf.mxu0
  %v520 = vadd.f32 0.0, %v519
  %v521 = vpop.f32.mrf.mxu0
  %522 = vmatprep.mubr.f32.mxu0 0.0
  %523 = vmatmul.mubr.f32.gmra.mxu0 %v235
  %v524 = vpop.f32.mrf.mxu0
  %v525 = vadd.f32 0.0, %v524
  %v526 = vpop.f32.mrf.mxu0
  %527 = vmatprep.mubr.f32.mxu0 0.0
  %528 = vmatmul.mubr.f32.gmra.mxu0 %v238
  %v529 = vpop.f32.mrf.mxu0
  %v530 = vadd.f32 0.0, %v529
  %v531 = vpop.f32.mrf.mxu0
  %532 = vmatprep.mubr.f32.mxu0 0.0
  %533 = vmatmul.mubr.f32.gmra.mxu0 %v241
  %v534 = vpop.f32.mrf.mxu0
  %v535 = vadd.f32 0.0, %v534
  %v536 = vpop.f32.mrf.mxu0
  %537 = vmatprep.mubr.f32.mxu0 0.0
  %538 = vmatmul.mubr.f32.gmra.mxu0 %v244
  %v539 = vpop.f32.mrf.mxu0
  %v540 = vadd.f32 0.0, %v539
  %v541 = vpop.f32.mrf.mxu0
  %542 = vmatprep.mubr.f32.mxu0 0.0
  %543 = vmatmul.mubr.f32.gmra.mxu0 %v247
  %v544 = vpop.f32.mrf.mxu0
  %v545 = vadd.f32 0.0, %v544
  %v546 = vpop.f32.mrf.mxu0
  %547 = vmatprep.mubr.f32.mxu0 0.0
  %548 = vmatmul.mubr.f32.gmra.mxu0 %v250
  %v549 = vpop.f32.mrf.mxu0
  %v550 = vadd.f32 0.0, %v549
  %v551 = vpop.f32.mrf.mxu0
  %552 = vmatprep.mubr.f32.mxu0 0.0
  %553 = vmatmul.mubr.f32.gmra.mxu0 %v253
  %v554 = vpop.f32.mrf.mxu0
  %v555 = vadd.f32 0.0, %v554
  %v556 = vpop.f32.mrf.mxu0
  %557 = vmatprep.mubr.f32.mxu0 0.0
  %558 = vmatmul.mubr.f32.gmra.mxu0 %v256
  %v559 = vpop.f32.mrf.mxu0
  %v560 = vadd.f32 0.0, %v559
  %v561 = vpop.f32.mrf.mxu0
  %562 = vdwg.mxu0
  %v563 = vpack.c.bf16 %v330, %v325
  %v564 = vpack.c.bf16 %v340, %v335
  %v565 = vpack.c.bf16 %v350, %v345
  %v566 = vpack.c.bf16 %v360, %v355
  %v567 = vpack.c.bf16 %v370, %v365
  %v568 = vpack.c.bf16 %v380, %v375
  %v569 = vpack.c.bf16 %v390, %v385
  %v570 = vpack.c.bf16 %v400, %v395
  %v571 = vpack.c.bf16 %v410, %v405
  %v572 = vpack.c.bf16 %v420, %v415
  %v573 = vpack.c.bf16 %v430, %v425
  %v574 = vpack.c.bf16 %v440, %v435
  %v575 = vpack.c.bf16 %v450, %v445
  %v576 = vpack.c.bf16 %v460, %v455
  %v577 = vpack.c.bf16 %v470, %v465
  %v578 = vpack.c.bf16 %v480, %v475
  %v579 = vpack.c.bf16 %v490, %v485
  %v580 = vpack.c.bf16 %v500, %v495
  %v581 = vpack.c.bf16 %v510, %v505
  %v582 = vpack.c.bf16 %v520, %v515
  %v583 = vpack.c.bf16 %v530, %v525
  %v584 = vpack.c.bf16 %v540, %v535
  %v585 = vpack.c.bf16 %v550, %v545
  %v586 = vpack.c.bf16 %v560, %v555
  %v611 = vunpack.c.l.b16 %v563
  %v612 = vunpack.c.h.b16 %v563
  %v613 = vunpack.c.l.b16 %v564
  %v614 = vunpack.c.h.b16 %v564
  %v615 = vunpack.c.l.b16 %v565
  %v616 = vunpack.c.h.b16 %v565
  %v617 = vunpack.c.l.b16 %v566
  %v618 = vunpack.c.h.b16 %v566
  %v619 = vunpack.c.l.b16 %v567
  %v620 = vunpack.c.h.b16 %v567
  %v621 = vunpack.c.l.b16 %v568
  %v622 = vunpack.c.h.b16 %v568
  %v623 = vunpack.c.l.b16 %v569
  %v624 = vunpack.c.h.b16 %v569
  %v625 = vunpack.c.l.b16 %v570
  %v626 = vunpack.c.h.b16 %v570
  %v627 = vunpack.c.l.b16 %v571
  %v628 = vunpack.c.h.b16 %v571
  %v629 = vunpack.c.l.b16 %v572
  %v630 = vunpack.c.h.b16 %v572
  %v631 = vunpack.c.l.b16 %v573
  %v632 = vunpack.c.h.b16 %v573
  %v633 = vunpack.c.l.b16 %v574
  %v634 = vunpack.c.h.b16 %v574
  %v635 = vunpack.c.l.b16 %v575
  %v636 = vunpack.c.h.b16 %v575
  %v637 = vunpack.c.l.b16 %v576
  %v638 = vunpack.c.h.b16 %v576
  %v639 = vunpack.c.l.b16 %v577
  %v640 = vunpack.c.h.b16 %v577
  %v641 = vunpack.c.l.b16 %v578
  %v642 = vunpack.c.h.b16 %v578
  %v643 = vunpack.c.l.b16 %v579
  %v644 = vunpack.c.h.b16 %v579
  %v645 = vunpack.c.l.b16 %v580
  %v646 = vunpack.c.h.b16 %v580
  %v647 = vunpack.c.l.b16 %v581
  %v648 = vunpack.c.h.b16 %v581
  %v649 = vunpack.c.l.b16 %v582
  %v650 = vunpack.c.h.b16 %v582
  %v651 = vunpack.c.l.b16 %v583
  %v652 = vunpack.c.h.b16 %v583
  %v653 = vunpack.c.l.b16 %v584
  %v654 = vunpack.c.h.b16 %v584
  %v655 = vunpack.c.l.b16 %v585
  %v656 = vunpack.c.h.b16 %v585
  %v657 = vunpack.c.l.b16 %v586
  %v658 = vunpack.c.h.b16 %v586
  %v659 = vpack.c.b16 %v611, %v611
  %v660 = vpack.c.b16 %v612, %v612
  %v661 = vpack.c.b16 %v613, %v613
  %v662 = vpack.c.b16 %v614, %v614
  %v663 = vpack.c.b16 %v615, %v615
  %v664 = vpack.c.b16 %v616, %v616
  %v665 = vpack.c.b16 %v617, %v617
  %v666 = vpack.c.b16 %v618, %v618
  %v667 = vpack.c.b16 %v619, %v619
  %v668 = vpack.c.b16 %v620, %v620
  %v669 = vpack.c.b16 %v621, %v621
  %v670 = vpack.c.b16 %v622, %v622
  %v671 = vpack.c.b16 %v623, %v623
  %v672 = vpack.c.b16 %v624, %v624
  %v673 = vpack.c.b16 %v625, %v625
  %v674 = vpack.c.b16 %v626, %v626
  %v675 = vpack.c.b16 %v627, %v627
  %v676 = vpack.c.b16 %v628, %v628
  %v677 = vpack.c.b16 %v629, %v629
  %v678 = vpack.c.b16 %v630, %v630
  %v679 = vpack.c.b16 %v631, %v631
  %v680 = vpack.c.b16 %v632, %v632
  %v681 = vpack.c.b16 %v633, %v633
  %v682 = vpack.c.b16 %v634, %v634
  %v683 = vpack.c.b16 %v635, %v635
  %v684 = vpack.c.b16 %v636, %v636
  %v685 = vpack.c.b16 %v637, %v637
  %v686 = vpack.c.b16 %v638, %v638
  %v687 = vpack.c.b16 %v639, %v639
  %v688 = vpack.c.b16 %v640, %v640
  %v689 = vpack.c.b16 %v641, %v641
  %v690 = vpack.c.b16 %v642, %v642
  %v691 = vpack.c.b16 %v643, %v643
  %v692 = vpack.c.b16 %v644, %v644
  %v693 = vpack.c.b16 %v645, %v645
  %v694 = vpack.c.b16 %v646, %v646
  %v695 = vpack.c.b16 %v647, %v647
  %v696 = vpack.c.b16 %v648, %v648
  %v697 = vpack.c.b16 %v649, %v649
  %v698 = vpack.c.b16 %v650, %v650
  %v699 = vpack.c.b16 %v651, %v651
  %v700 = vpack.c.b16 %v652, %v652
  %v701 = vpack.c.b16 %v653, %v653
  %v702 = vpack.c.b16 %v654, %v654
  %v703 = vpack.c.b16 %v655, %v655
  %v704 = vpack.c.b16 %v656, %v656
  %v705 = vpack.c.b16 %v657, %v657
  %v706 = vpack.c.b16 %v658, %v658
  %vm755 = vcmask 257024
  %756 = vst.msk [vmem:[%s3] sm:$0xf] %vm755, %v659
  %757 = vst.msk [vmem:[%s3 + $0x4] sm:$0xf] %vm755, %v660
  %758 = vst.msk [vmem:[%s3 + $0x8] sm:$0xf] %vm755, %v661
  %759 = vst.msk [vmem:[%s3 + $0xc] sm:$0xf] %vm755, %v662
  %760 = vst.msk [vmem:[%s3 + $0x10] sm:$0xf] %vm755, %v663
  %761 = vst.msk [vmem:[%s3 + $0x14] sm:$0xf] %vm755, %v664
  %762 = vst.msk [vmem:[%s3 + $0x18] sm:$0xf] %vm755, %v665
  %763 = vst.msk [vmem:[%s3 + $0x1c] sm:$0xf] %vm755, %v666
  %764 = vst.msk [vmem:[%s3 + $0x20] sm:$0xf] %vm755, %v667
  %765 = vst.msk [vmem:[%s3 + $0x24] sm:$0xf] %vm755, %v668
  %766 = vst.msk [vmem:[%s3 + $0x28] sm:$0xf] %vm755, %v669
  %767 = vst.msk [vmem:[%s3 + $0x2c] sm:$0xf] %vm755, %v670
  %768 = vst.msk [vmem:[%s3 + $0x30] sm:$0xf] %vm755, %v671
  %769 = vst.msk [vmem:[%s3 + $0x34] sm:$0xf] %vm755, %v672
  %770 = vst.msk [vmem:[%s3 + $0x38] sm:$0xf] %vm755, %v673
  %771 = vst.msk [vmem:[%s3 + $0x3c] sm:$0xf] %vm755, %v674
  %772 = vst.msk [vmem:[%s3 + $0x40] sm:$0xf] %vm755, %v675
  %773 = vst.msk [vmem:[%s3 + $0x44] sm:$0xf] %vm755, %v676
  %774 = vst.msk [vmem:[%s3 + $0x48] sm:$0xf] %vm755, %v677
  %775 = vst.msk [vmem:[%s3 + $0x4c] sm:$0xf] %vm755, %v678
  %776 = vst.msk [vmem:[%s3 + $0x50] sm:$0xf] %vm755, %v679
  %777 = vst.msk [vmem:[%s3 + $0x54] sm:$0xf] %vm755, %v680
  %778 = vst.msk [vmem:[%s3 + $0x58] sm:$0xf] %vm755, %v681
  %779 = vst.msk [vmem:[%s3 + $0x5c] sm:$0xf] %vm755, %v682
  %780 = vst.msk [vmem:[%s3 + $0x60] sm:$0xf] %vm755, %v683
  %781 = vst.msk [vmem:[%s3 + $0x64] sm:$0xf] %vm755, %v684
  %782 = vst.msk [vmem:[%s3 + $0x68] sm:$0xf] %vm755, %v685
  %783 = vst.msk [vmem:[%s3 + $0x6c] sm:$0xf] %vm755, %v686
  %784 = vst.msk [vmem:[%s3 + $0x70] sm:$0xf] %vm755, %v687
  %785 = vst.msk [vmem:[%s3 + $0x74] sm:$0xf] %vm755, %v688
  %786 = vst.msk [vmem:[%s3 + $0x78] sm:$0xf] %vm755, %v689
  %787 = vst.msk [vmem:[%s3 + $0x7c] sm:$0xf] %vm755, %v690
  %788 = vst.msk [vmem:[%s3 + $0x80] sm:$0xf] %vm755, %v691
  %789 = vst.msk [vmem:[%s3 + $0x84] sm:$0xf] %vm755, %v692
  %790 = vst.msk [vmem:[%s3 + $0x88] sm:$0xf] %vm755, %v693
  %791 = vst.msk [vmem:[%s3 + $0x8c] sm:$0xf] %vm755, %v694
  %792 = vst.msk [vmem:[%s3 + $0x90] sm:$0xf] %vm755, %v695
  %793 = vst.msk [vmem:[%s3 + $0x94] sm:$0xf] %vm755, %v696
  %794 = vst.msk [vmem:[%s3 + $0x98] sm:$0xf] %vm755, %v697
  %795 = vst.msk [vmem:[%s3 + $0x9c] sm:$0xf] %vm755, %v698
  %796 = vst.msk [vmem:[%s3 + $0xa0] sm:$0xf] %vm755, %v699
  %797 = vst.msk [vmem:[%s3 + $0xa4] sm:$0xf] %vm755, %v700
  %798 = vst.msk [vmem:[%s3 + $0xa8] sm:$0xf] %vm755, %v701
  %799 = vst.msk [vmem:[%s3 + $0xac] sm:$0xf] %vm755, %v702
  %800 = vst.msk [vmem:[%s3 + $0xb0] sm:$0xf] %vm755, %v703
  %801 = vst.msk [vmem:[%s3 + $0xb4] sm:$0xf] %vm755, %v704
  %802 = vst.msk [vmem:[%s3 + $0xb8] sm:$0xf] %vm755, %v705
  %803 = vst.msk [vmem:[%s3 + $0xbc] sm:$0xf] %vm755, %v706
  %v804 = vld [vmem:[%s2] sm:$0xff]
  %v805 = vld [vmem:[%s2 + $0x8] sm:$0xff]
  %v806 = vld [vmem:[%s2 + $0x10] sm:$0xff]
  %v807 = vld [vmem:[%s2 + $0x18] sm:$0xff]
  %vm808 = vcmask 261120
  %v810 = vsel %vm808, %v325, 0
  %v813 = vsel %vm808, %v330, 0
  %v816 = vsel %vm808, %v335, 0
  %v819 = vsel %vm808, %v340, 0
  %v822 = vsel %vm808, %v345, 0
  %v825 = vsel %vm808, %v350, 0
  %v828 = vsel %vm808, %v355, 0
  %v831 = vsel %vm808, %v360, 0
  %v834 = vsel %vm808, %v365, 0
  %v837 = vsel %vm808, %v370, 0
  %v840 = vsel %vm808, %v375, 0
  %v843 = vsel %vm808, %v380, 0
  %v846 = vsel %vm808, %v385, 0
  %v849 = vsel %vm808, %v390, 0
  %v852 = vsel %vm808, %v395, 0
  %v855 = vsel %vm808, %v400, 0
  %v858 = vsel %vm808, %v405, 0
  %v861 = vsel %vm808, %v410, 0
  %v864 = vsel %vm808, %v415, 0
  %v867 = vsel %vm808, %v420, 0
  %v870 = vsel %vm808, %v425, 0
  %v873 = vsel %vm808, %v430, 0
  %v876 = vsel %vm808, %v435, 0
  %v879 = vsel %vm808, %v440, 0
  %v882 = vsel %vm808, %v445, 0
  %v885 = vsel %vm808, %v450, 0
  %v888 = vsel %vm808, %v455, 0
  %v891 = vsel %vm808, %v460, 0
  %v894 = vsel %vm808, %v465, 0
  %v897 = vsel %vm808, %v470, 0
  %v900 = vsel %vm808, %v475, 0
  %v903 = vsel %vm808, %v480, 0
  %v906 = vsel %vm808, %v485, 0
  %v909 = vsel %vm808, %v490, 0
  %v912 = vsel %vm808, %v495, 0
  %v915 = vsel %vm808, %v500, 0
  %v918 = vsel %vm808, %v505, 0
  %v921 = vsel %vm808, %v510, 0
  %v924 = vsel %vm808, %v515, 0
  %v927 = vsel %vm808, %v520, 0
  %v930 = vsel %vm808, %v525, 0
  %v933 = vsel %vm808, %v530, 0
  %v936 = vsel %vm808, %v535, 0
  %v939 = vsel %vm808, %v540, 0
  %v942 = vsel %vm808, %v545, 0
  %v945 = vsel %vm808, %v550, 0
  %v948 = vsel %vm808, %v555, 0
  %v951 = vsel %vm808, %v560, 0
  %953 = vmatprep.subr.mxu0 0.0
  %954 = vmatpush1.msra.mxu0 0.0
  %955 = vmatprep.subr.mxu0 0.0
  %956 = vmatpush1.msra.mxu0 0.0
  %957 = vmatprep.subr.mxu0 0.0
  %958 = vmatpush1.msra.mxu0 0.0
  %959 = vmatprep.subr.mxu0 0.0
  %960 = vmatpush1.msra.mxu0 0.0
  %961 = vmatprep.subr.mxu0 0.0
  %962 = vmatpush1.msra.mxu0 0.0
  %963 = vmatprep.subr.mxu0 0.0
  %964 = vmatpush1.msra.mxu0 0.0
  %965 = vmatprep.subr.mxu0 0.0
  %966 = vmatpush1.msra.mxu0 0.0
  %967 = vmatprep.subr.mxu0 0.0
  %968 = vmatpush1.msra.mxu0 0.0
  %969 = vmatprep.subr.mxu0 0.0
  %970 = vmatpush1.msra.mxu0 0.0
  %971 = vmatprep.subr.mxu0 0.0
  %972 = vmatpush1.msra.mxu0 0.0
  %973 = vmatprep.subr.mxu0 0.0
  %974 = vmatpush1.msra.mxu0 0.0
  %975 = vmatprep.subr.mxu0 0.0
  %976 = vmatpush1.msra.mxu0 0.0
  %977 = vmatprep.subr.mxu0 0.0
  %978 = vmatpush1.msra.mxu0 %v807
  %979 = vmatprep.subr.mxu0 0.0
  %980 = vmatpush1.msra.mxu0 %v806
  %981 = vmatprep.subr.mxu0 0.0
  %982 = vmatpush1.msra.mxu0 %v805
  %983 = vmatprep.subr.mxu0 0.0
  %984 = vmatpush1.msra.mxu0 %v804
  %985 = vmatprep.subr.mxu0 0.0
  %986 = vmatpush2.msra.mxu0 0.0
  %987 = vmatprep.subr.mxu0 0.0
  %988 = vmatpush2.msra.mxu0 0.0
  %989 = vmatprep.subr.mxu0 0.0
  %990 = vmatpush2.msra.mxu0 0.0
  %991 = vmatprep.subr.mxu0 0.0
  %992 = vmatpush2.msra.mxu0 0.0
  %993 = vmatprep.subr.mxu0 0.0
  %994 = vmatpush2.msra.mxu0 0.0
  %995 = vmatprep.subr.mxu0 0.0
  %996 = vmatpush2.msra.mxu0 0.0
  %997 = vmatprep.subr.mxu0 0.0
  %998 = vmatpush2.msra.mxu0 0.0
  %999 = vmatprep.subr.mxu0 0.0
  %1000 = vmatpush2.msra.mxu0 0.0
  %1001 = vmatprep.subr.mxu0 0.0
  %1002 = vmatpush2.msra.mxu0 0.0
  %1003 = vmatprep.subr.mxu0 0.0
  %1004 = vmatpush2.msra.mxu0 0.0
  %1005 = vmatprep.subr.mxu0 0.0
  %1006 = vmatpush2.msra.mxu0 0.0
  %1007 = vmatprep.subr.mxu0 0.0
  %1008 = vmatpush2.msra.mxu0 0.0
  %1009 = vmatprep.subr.mxu0 0.0
  %1010 = vmatpush2.msra.mxu0 0.0
  %1011 = vmatprep.subr.mxu0 0.0
  %1012 = vmatpush2.msra.mxu0 0.0
  %1013 = vmatprep.subr.mxu0 0.0
  %1014 = vmatpush2.msra.mxu0 0.0
  %1015 = vmatprep.subr.mxu0 0.0
  %1016 = vmatpush2.msra.mxu0 0.0
  %1017 = vmatprep.mubr.f32.mxu0 0.0
  %1018 = vmatmul.mubr.f32.gmra.mxu0 %v810
  %v1019 = vpop.f32.mrf.mxu0
  %v1020 = vadd.f32 0.0, %v1019
  %v1021 = vpop.f32.mrf.mxu0
  %1022 = vmatprep.mubr.f32.mxu0 0.0
  %1023 = vmatmul.mubr.f32.gmra.mxu0 %v813
  %v1024 = vpop.f32.mrf.mxu0
  %v1025 = vadd.f32 0.0, %v1024
  %v1026 = vpop.f32.mrf.mxu0
  %1027 = vmatprep.mubr.f32.mxu0 0.0
  %1028 = vmatmul.mubr.f32.gmra.mxu0 %v816
  %v1029 = vpop.f32.mrf.mxu0
  %v1030 = vadd.f32 0.0, %v1029
  %v1031 = vpop.f32.mrf.mxu0
  %1032 = vmatprep.mubr.f32.mxu0 0.0
  %1033 = vmatmul.mubr.f32.gmra.mxu0 %v819
  %v1034 = vpop.f32.mrf.mxu0
  %v1035 = vadd.f32 0.0, %v1034
  %v1036 = vpop.f32.mrf.mxu0
  %1037 = vmatprep.mubr.f32.mxu0 0.0
  %1038 = vmatmul.mubr.f32.gmra.mxu0 %v822
  %v1039 = vpop.f32.mrf.mxu0
  %v1040 = vadd.f32 0.0, %v1039
  %v1041 = vpop.f32.mrf.mxu0
  %1042 = vmatprep.mubr.f32.mxu0 0.0
  %1043 = vmatmul.mubr.f32.gmra.mxu0 %v825
  %v1044 = vpop.f32.mrf.mxu0
  %v1045 = vadd.f32 0.0, %v1044
  %v1046 = vpop.f32.mrf.mxu0
  %1047 = vmatprep.mubr.f32.mxu0 0.0
  %1048 = vmatmul.mubr.f32.gmra.mxu0 %v828
  %v1049 = vpop.f32.mrf.mxu0
  %v1050 = vadd.f32 0.0, %v1049
  %v1051 = vpop.f32.mrf.mxu0
  %1052 = vmatprep.mubr.f32.mxu0 0.0
  %1053 = vmatmul.mubr.f32.gmra.mxu0 %v831
  %v1054 = vpop.f32.mrf.mxu0
  %v1055 = vadd.f32 0.0, %v1054
  %v1056 = vpop.f32.mrf.mxu0
  %1057 = vmatprep.mubr.f32.mxu0 0.0
  %1058 = vmatmul.mubr.f32.gmra.mxu0 %v834
  %v1059 = vpop.f32.mrf.mxu0
  %v1060 = vadd.f32 0.0, %v1059
  %v1061 = vpop.f32.mrf.mxu0
  %1062 = vmatprep.mubr.f32.mxu0 0.0
  %1063 = vmatmul.mubr.f32.gmra.mxu0 %v837
  %v1064 = vpop.f32.mrf.mxu0
  %v1065 = vadd.f32 0.0, %v1064
  %v1066 = vpop.f32.mrf.mxu0
  %1067 = vmatprep.mubr.f32.mxu0 0.0
  %1068 = vmatmul.mubr.f32.gmra.mxu0 %v840
  %v1069 = vpop.f32.mrf.mxu0
  %v1070 = vadd.f32 0.0, %v1069
  %v1071 = vpop.f32.mrf.mxu0
  %1072 = vmatprep.mubr.f32.mxu0 0.0
  %1073 = vmatmul.mubr.f32.gmra.mxu0 %v843
  %v1074 = vpop.f32.mrf.mxu0
  %v1075 = vadd.f32 0.0, %v1074
  %v1076 = vpop.f32.mrf.mxu0
  %1077 = vmatprep.mubr.f32.mxu0 0.0
  %1078 = vmatmul.mubr.f32.gmra.mxu0 %v846
  %v1079 = vpop.f32.mrf.mxu0
  %v1080 = vadd.f32 0.0, %v1079
  %v1081 = vpop.f32.mrf.mxu0
  %1082 = vmatprep.mubr.f32.mxu0 0.0
  %1083 = vmatmul.mubr.f32.gmra.mxu0 %v849
  %v1084 = vpop.f32.mrf.mxu0
  %v1085 = vadd.f32 0.0, %v1084
  %v1086 = vpop.f32.mrf.mxu0
  %1087 = vmatprep.mubr.f32.mxu0 0.0
  %1088 = vmatmul.mubr.f32.gmra.mxu0 %v852
  %v1089 = vpop.f32.mrf.mxu0
  %v1090 = vadd.f32 0.0, %v1089
  %v1091 = vpop.f32.mrf.mxu0
  %1092 = vmatprep.mubr.f32.mxu0 0.0
  %1093 = vmatmul.mubr.f32.gmra.mxu0 %v855
  %v1094 = vpop.f32.mrf.mxu0
  %v1095 = vadd.f32 0.0, %v1094
  %v1096 = vpop.f32.mrf.mxu0
  %1097 = vmatprep.mubr.f32.mxu0 0.0
  %1098 = vmatmul.mubr.f32.gmra.mxu0 %v858
  %v1099 = vpop.f32.mrf.mxu0
  %v1100 = vadd.f32 0.0, %v1099
  %v1101 = vpop.f32.mrf.mxu0
  %1102 = vmatprep.mubr.f32.mxu0 0.0
  %1103 = vmatmul.mubr.f32.gmra.mxu0 %v861
  %v1104 = vpop.f32.mrf.mxu0
  %v1105 = vadd.f32 0.0, %v1104
  %v1106 = vpop.f32.mrf.mxu0
  %1107 = vmatprep.mubr.f32.mxu0 0.0
  %1108 = vmatmul.mubr.f32.gmra.mxu0 %v864
  %v1109 = vpop.f32.mrf.mxu0
  %v1110 = vadd.f32 0.0, %v1109
  %v1111 = vpop.f32.mrf.mxu0
  %1112 = vmatprep.mubr.f32.mxu0 0.0
  %1113 = vmatmul.mubr.f32.gmra.mxu0 %v867
  %v1114 = vpop.f32.mrf.mxu0
  %v1115 = vadd.f32 0.0, %v1114
  %v1116 = vpop.f32.mrf.mxu0
  %1117 = vmatprep.mubr.f32.mxu0 0.0
  %1118 = vmatmul.mubr.f32.gmra.mxu0 %v870
  %v1119 = vpop.f32.mrf.mxu0
  %v1120 = vadd.f32 0.0, %v1119
  %v1121 = vpop.f32.mrf.mxu0
  %1122 = vmatprep.mubr.f32.mxu0 0.0
  %1123 = vmatmul.mubr.f32.gmra.mxu0 %v873
  %v1124 = vpop.f32.mrf.mxu0
  %v1125 = vadd.f32 0.0, %v1124
  %v1126 = vpop.f32.mrf.mxu0
  %1127 = vmatprep.mubr.f32.mxu0 0.0
  %1128 = vmatmul.mubr.f32.gmra.mxu0 %v876
  %v1129 = vpop.f32.mrf.mxu0
  %v1130 = vadd.f32 0.0, %v1129
  %v1131 = vpop.f32.mrf.mxu0
  %1132 = vmatprep.mubr.f32.mxu0 0.0
  %1133 = vmatmul.mubr.f32.gmra.mxu0 %v879
  %v1134 = vpop.f32.mrf.mxu0
  %v1135 = vadd.f32 0.0, %v1134
  %v1136 = vpop.f32.mrf.mxu0
  %1137 = vmatprep.mubr.f32.mxu0 0.0
  %1138 = vmatmul.mubr.f32.gmra.mxu0 %v882
  %v1139 = vpop.f32.mrf.mxu0
  %v1140 = vadd.f32 0.0, %v1139
  %v1141 = vpop.f32.mrf.mxu0
  %1142 = vmatprep.mubr.f32.mxu0 0.0
  %1143 = vmatmul.mubr.f32.gmra.mxu0 %v885
  %v1144 = vpop.f32.mrf.mxu0
  %v1145 = vadd.f32 0.0, %v1144
  %v1146 = vpop.f32.mrf.mxu0
  %1147 = vmatprep.mubr.f32.mxu0 0.0
  %1148 = vmatmul.mubr.f32.gmra.mxu0 %v888
  %v1149 = vpop.f32.mrf.mxu0
  %v1150 = vadd.f32 0.0, %v1149
  %v1151 = vpop.f32.mrf.mxu0
  %1152 = vmatprep.mubr.f32.mxu0 0.0
  %1153 = vmatmul.mubr.f32.gmra.mxu0 %v891
  %v1154 = vpop.f32.mrf.mxu0
  %v1155 = vadd.f32 0.0, %v1154
  %v1156 = vpop.f32.mrf.mxu0
  %1157 = vmatprep.mubr.f32.mxu0 0.0
  %1158 = vmatmul.mubr.f32.gmra.mxu0 %v894
  %v1159 = vpop.f32.mrf.mxu0
  %v1160 = vadd.f32 0.0, %v1159
  %v1161 = vpop.f32.mrf.mxu0
  %1162 = vmatprep.mubr.f32.mxu0 0.0
  %1163 = vmatmul.mubr.f32.gmra.mxu0 %v897
  %v1164 = vpop.f32.mrf.mxu0
  %v1165 = vadd.f32 0.0, %v1164
  %v1166 = vpop.f32.mrf.mxu0
  %1167 = vmatprep.mubr.f32.mxu0 0.0
  %1168 = vmatmul.mubr.f32.gmra.mxu0 %v900
  %v1169 = vpop.f32.mrf.mxu0
  %v1170 = vadd.f32 0.0, %v1169
  %v1171 = vpop.f32.mrf.mxu0
  %1172 = vmatprep.mubr.f32.mxu0 0.0
  %1173 = vmatmul.mubr.f32.gmra.mxu0 %v903
  %v1174 = vpop.f32.mrf.mxu0
  %v1175 = vadd.f32 0.0, %v1174
  %v1176 = vpop.f32.mrf.mxu0
  %1177 = vmatprep.mubr.f32.mxu0 0.0
  %1178 = vmatmul.mubr.f32.gmra.mxu0 %v906
  %v1179 = vpop.f32.mrf.mxu0
  %v1180 = vadd.f32 0.0, %v1179
  %v1181 = vpop.f32.mrf.mxu0
  %1182 = vmatprep.mubr.f32.mxu0 0.0
  %1183 = vmatmul.mubr.f32.gmra.mxu0 %v909
  %v1184 = vpop.f32.mrf.mxu0
  %v1185 = vadd.f32 0.0, %v1184
  %v1186 = vpop.f32.mrf.mxu0
  %1187 = vmatprep.mubr.f32.mxu0 0.0
  %1188 = vmatmul.mubr.f32.gmra.mxu0 %v912
  %v1189 = vpop.f32.mrf.mxu0
  %v1190 = vadd.f32 0.0, %v1189
  %v1191 = vpop.f32.mrf.mxu0
  %1192 = vmatprep.mubr.f32.mxu0 0.0
  %1193 = vmatmul.mubr.f32.gmra.mxu0 %v915
  %v1194 = vpop.f32.mrf.mxu0
  %v1195 = vadd.f32 0.0, %v1194
  %v1196 = vpop.f32.mrf.mxu0
  %1197 = vmatprep.mubr.f32.mxu0 0.0
  %1198 = vmatmul.mubr.f32.gmra.mxu0 %v918
  %v1199 = vpop.f32.mrf.mxu0
  %v1200 = vadd.f32 0.0, %v1199
  %v1201 = vpop.f32.mrf.mxu0
  %1202 = vmatprep.mubr.f32.mxu0 0.0
  %1203 = vmatmul.mubr.f32.gmra.mxu0 %v921
  %v1204 = vpop.f32.mrf.mxu0
  %v1205 = vadd.f32 0.0, %v1204
  %v1206 = vpop.f32.mrf.mxu0
  %1207 = vmatprep.mubr.f32.mxu0 0.0
  %1208 = vmatmul.mubr.f32.gmra.mxu0 %v924
  %v1209 = vpop.f32.mrf.mxu0
  %v1210 = vadd.f32 0.0, %v1209
  %v1211 = vpop.f32.mrf.mxu0
  %1212 = vmatprep.mubr.f32.mxu0 0.0
  %1213 = vmatmul.mubr.f32.gmra.mxu0 %v927
  %v1214 = vpop.f32.mrf.mxu0
  %v1215 = vadd.f32 0.0, %v1214
  %v1216 = vpop.f32.mrf.mxu0
  %1217 = vmatprep.mubr.f32.mxu0 0.0
  %1218 = vmatmul.mubr.f32.gmra.mxu0 %v930
  %v1219 = vpop.f32.mrf.mxu0
  %v1220 = vadd.f32 0.0, %v1219
  %v1221 = vpop.f32.mrf.mxu0
  %1222 = vmatprep.mubr.f32.mxu0 0.0
  %1223 = vmatmul.mubr.f32.gmra.mxu0 %v933
  %v1224 = vpop.f32.mrf.mxu0
  %v1225 = vadd.f32 0.0, %v1224
  %v1226 = vpop.f32.mrf.mxu0
  %1227 = vmatprep.mubr.f32.mxu0 0.0
  %1228 = vmatmul.mubr.f32.gmra.mxu0 %v936
  %v1229 = vpop.f32.mrf.mxu0
  %v1230 = vadd.f32 0.0, %v1229
  %v1231 = vpop.f32.mrf.mxu0
  %1232 = vmatprep.mubr.f32.mxu0 0.0
  %1233 = vmatmul.mubr.f32.gmra.mxu0 %v939
  %v1234 = vpop.f32.mrf.mxu0
  %v1235 = vadd.f32 0.0, %v1234
  %v1236 = vpop.f32.mrf.mxu0
  %1237 = vmatprep.mubr.f32.mxu0 0.0
  %1238 = vmatmul.mubr.f32.gmra.mxu0 %v942
  %v1239 = vpop.f32.mrf.mxu0
  %v1240 = vadd.f32 0.0, %v1239
  %v1241 = vpop.f32.mrf.mxu0
  %1242 = vmatprep.mubr.f32.mxu0 0.0
  %1243 = vmatmul.mubr.f32.gmra.mxu0 %v945
  %v1244 = vpop.f32.mrf.mxu0
  %v1245 = vadd.f32 0.0, %v1244
  %v1246 = vpop.f32.mrf.mxu0
  %1247 = vmatprep.mubr.f32.mxu0 0.0
  %1248 = vmatmul.mubr.f32.gmra.mxu0 %v948
  %v1249 = vpop.f32.mrf.mxu0
  %v1250 = vadd.f32 0.0, %v1249
  %v1251 = vpop.f32.mrf.mxu0
  %1252 = vmatprep.mubr.f32.mxu0 0.0
  %1253 = vmatmul.mubr.f32.gmra.mxu0 %v951
  %v1254 = vpop.f32.mrf.mxu0
  %v1255 = vadd.f32 0.0, %v1254
  %v1256 = vpop.f32.mrf.mxu0
  %1257 = vdwg.mxu0
  %vm1258 = vcmask 31744
  %1259 = vst.msk [vmem:[%s4] sm:$0xff] %vm1258, %v1020
  %1260 = vst.msk [vmem:[%s4 + $0x8] sm:$0xff] %vm1258, %v1025
  %1261 = vst.msk [vmem:[%s4 + $0x10] sm:$0xff] %vm1258, %v1030
  %1262 = vst.msk [vmem:[%s4 + $0x18] sm:$0xff] %vm1258, %v1035
  %1263 = vst.msk [vmem:[%s4 + $0x20] sm:$0xff] %vm1258, %v1040
  %1264 = vst.msk [vmem:[%s4 + $0x28] sm:$0xff] %vm1258, %v1045
  %1265 = vst.msk [vmem:[%s4 + $0x30] sm:$0xff] %vm1258, %v1050
  %1266 = vst.msk [vmem:[%s4 + $0x38] sm:$0xff] %vm1258, %v1055
  %1267 = vst.msk [vmem:[%s4 + $0x40] sm:$0xff] %vm1258, %v1060
  %1268 = vst.msk [vmem:[%s4 + $0x48] sm:$0xff] %vm1258, %v1065
  %1269 = vst.msk [vmem:[%s4 + $0x50] sm:$0xff] %vm1258, %v1070
  %1270 = vst.msk [vmem:[%s4 + $0x58] sm:$0xff] %vm1258, %v1075
  %1271 = vst.msk [vmem:[%s4 + $0x60] sm:$0xff] %vm1258, %v1080
  %1272 = vst.msk [vmem:[%s4 + $0x68] sm:$0xff] %vm1258, %v1085
  %1273 = vst.msk [vmem:[%s4 + $0x70] sm:$0xff] %vm1258, %v1090
  %1274 = vst.msk [vmem:[%s4 + $0x78] sm:$0xff] %vm1258, %v1095
  %1275 = vst.msk [vmem:[%s4 + $0x80] sm:$0xff] %vm1258, %v1100
  %1276 = vst.msk [vmem:[%s4 + $0x88] sm:$0xff] %vm1258, %v1105
  %1277 = vst.msk [vmem:[%s4 + $0x90] sm:$0xff] %vm1258, %v1110
  %1278 = vst.msk [vmem:[%s4 + $0x98] sm:$0xff] %vm1258, %v1115
  %1279 = vst.msk [vmem:[%s4 + $0xa0] sm:$0xff] %vm1258, %v1120
  %1280 = vst.msk [vmem:[%s4 + $0xa8] sm:$0xff] %vm1258, %v1125
  %1281 = vst.msk [vmem:[%s4 + $0xb0] sm:$0xff] %vm1258, %v1130
  %1282 = vst.msk [vmem:[%s4 + $0xb8] sm:$0xff] %vm1258, %v1135
  %1283 = vst.msk [vmem:[%s4 + $0xc0] sm:$0xff] %vm1258, %v1140
  %1284 = vst.msk [vmem:[%s4 + $0xc8] sm:$0xff] %vm1258, %v1145
  %1285 = vst.msk [vmem:[%s4 + $0xd0] sm:$0xff] %vm1258, %v1150
  %1286 = vst.msk [vmem:[%s4 + $0xd8] sm:$0xff] %vm1258, %v1155
  %1287 = vst.msk [vmem:[%s4 + $0xe0] sm:$0xff] %vm1258, %v1160
  %1288 = vst.msk [vmem:[%s4 + $0xe8] sm:$0xff] %vm1258, %v1165
  %1289 = vst.msk [vmem:[%s4 + $0xf0] sm:$0xff] %vm1258, %v1170
  %1290 = vst.msk [vmem:[%s4 + $0xf8] sm:$0xff] %vm1258, %v1175
  %1291 = vst.msk [vmem:[%s4 + $0x100] sm:$0xff] %vm1258, %v1180
  %1292 = vst.msk [vmem:[%s4 + $0x108] sm:$0xff] %vm1258, %v1185
  %1293 = vst.msk [vmem:[%s4 + $0x110] sm:$0xff] %vm1258, %v1190
  %1294 = vst.msk [vmem:[%s4 + $0x118] sm:$0xff] %vm1258, %v1195
  %1295 = vst.msk [vmem:[%s4 + $0x120] sm:$0xff] %vm1258, %v1200
  %1296 = vst.msk [vmem:[%s4 + $0x128] sm:$0xff] %vm1258, %v1205
  %1297 = vst.msk [vmem:[%s4 + $0x130] sm:$0xff] %vm1258, %v1210
  %1298 = vst.msk [vmem:[%s4 + $0x138] sm:$0xff] %vm1258, %v1215
  %1299 = vst.msk [vmem:[%s4 + $0x140] sm:$0xff] %vm1258, %v1220
  %1300 = vst.msk [vmem:[%s4 + $0x148] sm:$0xff] %vm1258, %v1225
  %1301 = vst.msk [vmem:[%s4 + $0x150] sm:$0xff] %vm1258, %v1230
  %1302 = vst.msk [vmem:[%s4 + $0x158] sm:$0xff] %vm1258, %v1235
  %1303 = vst.msk [vmem:[%s4 + $0x160] sm:$0xff] %vm1258, %v1240
  %1304 = vst.msk [vmem:[%s4 + $0x168] sm:$0xff] %vm1258, %v1245
  %1305 = vst.msk [vmem:[%s4 + $0x170] sm:$0xff] %vm1258, %v1250
  %1306 = vst.msk [vmem:[%s4 + $0x178] sm:$0xff] %vm1258, %v1255
  // Predicated region
  $region14: #{tpu_custom_call.1} parent=0 // pred_check
    _
  $region15: #{tpu_custom_call.1} parent=0 // pred_check_branch
    %1308 = sbr.rel (0) target = $region17
  $region16: #{tpu_custom_call.1} parent=0 // pred_region
    _
  $region17: #{tpu_custom_call.1} parent=0 // pred_fallthru
    _
  // Predicated region
  $region18: #{tpu_custom_call.1} parent=0 // pred_check
    _
  $region19: #{tpu_custom_call.1} parent=0 // pred_check_branch
    %1310 = sbr.rel (0) target = $region21
  $region20: #{tpu_custom_call.1} parent=0 // pred_region
    _
  $region21: #{tpu_custom_call.1} parent=0 // pred_fallthru
    _
  // Predicated region
  $region22: #{tpu_custom_call.1} parent=0 // pred_check
    _
  $region23: #{tpu_custom_call.1} parent=0 // pred_check_branch
    %1312 = sbr.rel (0) target = $region25
  $region24: #{tpu_custom_call.1} parent=0 // pred_region
    _
  $region25: #{tpu_custom_call.1} parent=0 // pred_fallthru
    _
  // Predicated region
  $region26: #{tpu_custom_call.1} parent=0 // pred_check
    _
  $region27: #{tpu_custom_call.1} parent=0 // pred_check_branch
    %1314 = sbr.rel (0) target = $region29
  $region28: #{tpu_custom_call.1} parent=0 // pred_region
    _
  $region29: #{tpu_custom_call.1} parent=0 // pred_fallthru
    _

</llo_original>
